<compile_context>
chip_gen: v7x
topology: tpu7x:2x2x1
jax: 0.10.0
libtpu: 0.0.40
codegen_flags: <defaults>
</compile_context>

<pallas_src>
import functools

import jax
import jax.numpy as jnp
from jax.experimental import pallas as pl
from jax.experimental.pallas import tpu as pltpu


def decoder_kernel(*refs, num_layers):
    """refs = (x, w_1..w_n, b_1..b_n, out). All blocks live in VMEM."""
    x_ref = refs[0]
    w_refs = refs[1:1 + num_layers]
    b_refs = refs[1 + num_layers:1 + 2 * num_layers]
    o_ref = refs[1 + 2 * num_layers]

    h = x_ref[...]                                            # bf16 (TILE_B, E)
    for layer in range(num_layers):                           # statically unrolled
        acc = jnp.dot(h, w_refs[layer][...],                  # bf16 x bf16 -> f32
                      preferred_element_type=jnp.float32)
        acc = acc + b_refs[layer][...]                        # f32 epilogue
        if layer < num_layers - 1:                            # hidden: ReLU
            acc = jnp.maximum(acc, 0.0)
            h = acc.astype(jnp.bfloat16)                      # next MXU operand
        else:                                                 # final: identity
            h = acc
    o_ref[...] = h.astype(o_ref.dtype)


def _pick_tile_b(batch, cap=2048):
    """Batch tile: multiple of 8 sublanes, preferably a multiple of 256
    (v6e/v7x MXU height), preferably dividing the (8-rounded) batch so no
    pad/slice round trips are needed, split into >=2 tiles when the batch is
    big enough to feed both v7x TensorCores, and as large as possible (<= cap)
    to amortize the ~0.35 us per-grid-step pipeline overhead."""
    padded = -(-batch // 8) * 8
    if padded <= cap:
        if padded >= 1024 and padded % 512 == 0:
            return padded // 2            # two full-size tiles -> both v7x TCs busy
        return padded                     # one big tile, zero padding
    # Large batch: biggest divisor of the padded batch that is a multiple of
    # 256 (then of 8) and <= cap; last resort: cap (accepts some padding).
    for step in (256, 8):
        for t in range(cap - cap % step, step - 1, -step):
            if t >= 256 and padded % t == 0:
                return t
    return cap


def decoder_forward(x, weights, biases, *, tile_b=None):
    """x: (B, embeddingDim) f32. weights[i]: (in_i, out_i) f32. biases[i]: (1, out_i) f32."""
    B, E = x.shape
    n = len(weights)
    out_dim = weights[-1].shape[1]

    # Lane-dense final output: pad dataDim up to a multiple of 128 with zero
    # weight/bias columns (sliced off afterwards). No-op when already aligned.
    out_pad = -(-out_dim // 128) * 128
    weights = list(weights)
    biases = list(biases)
    if out_pad != out_dim:
        weights[-1] = jnp.pad(weights[-1], ((0, 0), (0, out_pad - out_dim)))
        biases[-1] = jnp.pad(biases[-1], ((0, 0), (0, out_pad - out_dim)))

    # bf16 MXU operands; biases stay f32 for the f32 epilogue.
    w_bf16 = [w.astype(jnp.bfloat16) for w in weights]
    b_f32 = [b.astype(jnp.float32) for b in biases]

    if tile_b is None:
        tile_b = _pick_tile_b(B)
    tile_b = max(8, -(-tile_b // 8) * 8)
    padded_b = -(-B // tile_b) * tile_b
    xp = x.astype(jnp.bfloat16)
    if padded_b != B:
        xp = jnp.pad(xp, ((0, padded_b - B), (0, 0)))

    kernel = functools.partial(decoder_kernel, num_layers=n)

    x_spec = pl.BlockSpec((tile_b, E), lambda i: (i, 0))
    w_specs = [pl.BlockSpec(w.shape, lambda i: (0, 0)) for w in w_bf16]
    b_specs = [pl.BlockSpec(b.shape, lambda i: (0, 0)) for b in b_f32]
    out_spec = pl.BlockSpec((tile_b, out_pad), lambda i: (i, 0))

    # VMEM estimate: double-buffered x/out stream + (double-buffered) resident
    # weights/biases.  Clamp the scoped limit to <= 64 MiB (v7x physical VMEM).
    est = (2 * tile_b * E * 2 + 2 * tile_b * out_pad * 4
           + 2 * sum(int(w.size) * 2 for w in w_bf16)
           + 2 * sum(int(b.size) * 4 for b in b_f32))
    vmem_limit = int(min(64 * 1024 * 1024, max(32 * 1024 * 1024, 2 * est)))

    out = pl.pallas_call(
        kernel,
        out_shape=jax.ShapeDtypeStruct((padded_b, out_pad), jnp.float32),
        grid=(padded_b // tile_b,),
        in_specs=[x_spec, *w_specs, *b_specs],
        out_specs=out_spec,
        compiler_params=pltpu.CompilerParams(
            dimension_semantics=("parallel",),
            vmem_limit_bytes=vmem_limit),
    )(xp, *w_bf16, *b_f32)

    if padded_b != B or out_pad != out_dim:
        out = out[:B, :out_dim]
    return out


def init_params(key, embedding_dim, decompress_dims, data_dim):
    """Deterministic init matching torch.nn.Linear default (uniform +-1/sqrt(fan_in)).

    Weights are stored transposed: (in, out)."""
    dims = [embedding_dim] + list(decompress_dims) + [data_dim]
    weights, biases = [], []
    for i in range(len(dims) - 1):
        fan_in, fan_out = dims[i], dims[i + 1]
        key, kw, kb = jax.random.split(key, 3)
        bound = 1.0 / jnp.sqrt(fan_in)
        w = jax.random.uniform(kw, (fan_in, fan_out), jnp.float32, -bound, bound)
        b = jax.random.uniform(kb, (1, fan_out), jnp.float32, -bound, bound)
        weights.append(w)
        biases.append(b)
    return weights, biases


def reference_forward(x, weights, biases):
    """Pure-JAX f32 reference mirroring the PyTorch Decoder exactly."""
    h = x
    n = len(weights)
    for i in range(n):
        h = h @ weights[i] + biases[i]
        if i < n - 1:
            h = jnp.maximum(h, 0.0)
    return h


if __name__ == "__main__":
    embedding_dim = 32
    decompress_dims = (64, 128)   # Linear->ReLU for each
    data_dim = 128                # final Linear, no activation
    batch = 64

    key = jax.random.PRNGKey(0)
    key, kx = jax.random.split(key)
    x = jax.random.normal(kx, (batch, embedding_dim), dtype=jnp.float32)

    weights, biases = init_params(key, embedding_dim, decompress_dims, data_dim)

    out = decoder_forward(x, weights, biases)   # default (large) batch tile
    out = jax.block_until_ready(out)

    ref = reference_forward(x, weights, biases)
    assert out.shape == (batch, data_dim), out.shape
    # bf16 MXU operands with f32 accumulation -> loosened tolerance vs f32 ref.
    assert jnp.allclose(out, ref, rtol=3e-2, atol=3e-2), "mismatch vs JAX reference"

    print("KERNEL_OK")
</pallas_src>

<mosaic_0001>
module attributes {stable_mosaic.version = 11 : i64} {
  func.func @decoder_kernel(%arg0: i32, %arg1: memref<64x32xbf16, #tpu.memory_space<vmem>>, %arg2: memref<32x64xbf16, #tpu.memory_space<vmem>>, %arg3: memref<64x128xbf16, #tpu.memory_space<vmem>>, %arg4: memref<128x128xbf16, #tpu.memory_space<vmem>>, %arg5: memref<1x64xf32, #tpu.memory_space<vmem>>, %arg6: memref<1x128xf32, #tpu.memory_space<vmem>>, %arg7: memref<1x128xf32, #tpu.memory_space<vmem>>, %arg8: memref<64x128xf32, #tpu.memory_space<vmem>>) attributes {dimension_semantics = [#tpu.dimension_semantics<parallel>], iteration_bounds = array<i64: 1>, scalar_prefetch = 0 : i64, scratch_operands = 0 : i64, tpu.core_type = #tpu.core_type<tc>, window_params = [{transform_indices = @transform_0, window_bounds = array<i64: 64, 32>}, {pipeline_mode = #tpu.pipeline_mode<synchronous>, transform_indices = @transform_1, window_bounds = array<i64: 32, 64>}, {pipeline_mode = #tpu.pipeline_mode<synchronous>, transform_indices = @transform_2, window_bounds = array<i64: 64, 128>}, {pipeline_mode = #tpu.pipeline_mode<synchronous>, transform_indices = @transform_3, window_bounds = array<i64: 128, 128>}, {pipeline_mode = #tpu.pipeline_mode<synchronous>, transform_indices = @transform_4, window_bounds = array<i64: 1, 64>}, {pipeline_mode = #tpu.pipeline_mode<synchronous>, transform_indices = @transform_5, window_bounds = array<i64: 1, 128>}, {pipeline_mode = #tpu.pipeline_mode<synchronous>, transform_indices = @transform_6, window_bounds = array<i64: 1, 128>}, {transform_indices = @transform_7, window_bounds = array<i64: 64, 128>}]} {
    %c0 = arith.constant 0 : index
    %c0_0 = arith.constant 0 : index
    %0 = vector.load %arg1[%c0, %c0_0] : memref<64x32xbf16, #tpu.memory_space<vmem>>, vector<64x32xbf16>
    %c0_1 = arith.constant 0 : index
    %c0_2 = arith.constant 0 : index
    %1 = vector.load %arg2[%c0_1, %c0_2] : memref<32x64xbf16, #tpu.memory_space<vmem>>, vector<32x64xbf16>
    %cst = arith.constant dense<0.000000e+00> : vector<64x64xf32>
    %2 = tpu.matmul %0, %1, %cst {dimension_numbers = #tpu.dot_dimension_numbers<[1], [0], [0], [1], [0, 0, 1, 1], [], []>} : vector<64x32xbf16>, vector<32x64xbf16>, vector<64x64xf32> -> vector<64x64xf32>
    %c0_3 = arith.constant 0 : index
    %c0_4 = arith.constant 0 : index
    %3 = vector.load %arg5[%c0_3, %c0_4] : memref<1x64xf32, #tpu.memory_space<vmem>>, vector<1x64xf32>
    %4 = vector.broadcast %3 : vector<1x64xf32> to vector<64x64xf32>
    %5 = arith.addf %2, %4 : vector<64x64xf32>
    %cst_5 = arith.constant 0.000000e+00 : f32
    %6 = vector.broadcast %cst_5 : f32 to vector<64x64xf32>
    %7 = arith.maximumf %5, %6 : vector<64x64xf32>
    %8 = arith.truncf %7 : vector<64x64xf32> to vector<64x64xbf16>
    %c0_6 = arith.constant 0 : index
    %c0_7 = arith.constant 0 : index
    %9 = vector.load %arg3[%c0_6, %c0_7] : memref<64x128xbf16, #tpu.memory_space<vmem>>, vector<64x128xbf16>
    %cst_8 = arith.constant dense<0.000000e+00> : vector<64x128xf32>
    %10 = tpu.matmul %8, %9, %cst_8 {dimension_numbers = #tpu.dot_dimension_numbers<[1], [0], [0], [1], [0, 0, 1, 1], [], []>} : vector<64x64xbf16>, vector<64x128xbf16>, vector<64x128xf32> -> vector<64x128xf32>
    %c0_9 = arith.constant 0 : index
    %c0_10 = arith.constant 0 : index
    %11 = vector.load %arg6[%c0_9, %c0_10] : memref<1x128xf32, #tpu.memory_space<vmem>>, vector<1x128xf32>
    %12 = vector.broadcast %11 : vector<1x128xf32> to vector<64x128xf32>
    %13 = arith.addf %10, %12 : vector<64x128xf32>
    %cst_11 = arith.constant 0.000000e+00 : f32
    %14 = vector.broadcast %cst_11 : f32 to vector<64x128xf32>
    %15 = arith.maximumf %13, %14 : vector<64x128xf32>
    %16 = arith.truncf %15 : vector<64x128xf32> to vector<64x128xbf16>
    %c0_12 = arith.constant 0 : index
    %c0_13 = arith.constant 0 : index
    %17 = vector.load %arg4[%c0_12, %c0_13] : memref<128x128xbf16, #tpu.memory_space<vmem>>, vector<128x128xbf16>
    %cst_14 = arith.constant dense<0.000000e+00> : vector<64x128xf32>
    %18 = tpu.matmul %16, %17, %cst_14 {dimension_numbers = #tpu.dot_dimension_numbers<[1], [0], [0], [1], [0, 0, 1, 1], [], []>} : vector<64x128xbf16>, vector<128x128xbf16>, vector<64x128xf32> -> vector<64x128xf32>
    %c0_15 = arith.constant 0 : index
    %c0_16 = arith.constant 0 : index
    %19 = vector.load %arg7[%c0_15, %c0_16] : memref<1x128xf32, #tpu.memory_space<vmem>>, vector<1x128xf32>
    %20 = vector.broadcast %19 : vector<1x128xf32> to vector<64x128xf32>
    %21 = arith.addf %18, %20 : vector<64x128xf32>
    %c0_17 = arith.constant 0 : index
    %c0_18 = arith.constant 0 : index
    %22 = vector.load %arg8[%c0_17, %c0_18] : memref<64x128xf32, #tpu.memory_space<vmem>>, vector<64x128xf32>
    tpu.vector_store %arg8[%c0_17, %c0_18], %21 {strides = array<i32>} : memref<64x128xf32, #tpu.memory_space<vmem>>, vector<64x128xf32>,
    return
  }
  func.func @transform_0(%arg0: i32) -> (i32, i32) {
    %c0_i32 = arith.constant 0 : i32
    %c0_i32_0 = arith.constant 0 : i32
    return %arg0, %c0_i32 : i32, i32
  }
  func.func @transform_1(%arg0: i32) -> (i32, i32) {
    %c0_i32 = arith.constant 0 : i32
    %c0_i32_0 = arith.constant 0 : i32
    %c0_i32_1 = arith.constant 0 : i32
    return %c0_i32, %c0_i32_0 : i32, i32
  }
  func.func @transform_2(%arg0: i32) -> (i32, i32) {
    %c0_i32 = arith.constant 0 : i32
    %c0_i32_0 = arith.constant 0 : i32
    %c0_i32_1 = arith.constant 0 : i32
    return %c0_i32, %c0_i32_0 : i32, i32
  }
  func.func @transform_3(%arg0: i32) -> (i32, i32) {
    %c0_i32 = arith.constant 0 : i32
    %c0_i32_0 = arith.constant 0 : i32
    %c0_i32_1 = arith.constant 0 : i32
    return %c0_i32, %c0_i32_0 : i32, i32
  }
  func.func @transform_4(%arg0: i32) -> (i32, i32) {
    %c0_i32 = arith.constant 0 : i32
    %c0_i32_0 = arith.constant 0 : i32
    %c0_i32_1 = arith.constant 0 : i32
    return %c0_i32, %c0_i32_0 : i32, i32
  }
  func.func @transform_5(%arg0: i32) -> (i32, i32) {
    %c0_i32 = arith.constant 0 : i32
    %c0_i32_0 = arith.constant 0 : i32
    %c0_i32_1 = arith.constant 0 : i32
    return %c0_i32, %c0_i32_0 : i32, i32
  }
  func.func @transform_6(%arg0: i32) -> (i32, i32) {
    %c0_i32 = arith.constant 0 : i32
    %c0_i32_0 = arith.constant 0 : i32
    %c0_i32_1 = arith.constant 0 : i32
    return %c0_i32, %c0_i32_0 : i32, i32
  }
  func.func @transform_7(%arg0: i32) -> (i32, i32) {
    %c0_i32 = arith.constant 0 : i32
    %c0_i32_0 = arith.constant 0 : i32
    return %arg0, %c0_i32 : i32, i32
  }
}

</mosaic_0001>

<llo_original>
// kernel: tpu_custom_call.1
$region0: #{tpu_custom_call.1}
  #allocation0 [shape = 'u32[]', space=smem, size = 0x4, offset = 0x4, fixed_abs, tag = 'smem constant byte address 0x4 - core index']
  #allocation1 [shape = 'u32[144,128]{1,0:T(1,128)}', space=vmem, size = 0x12000, scoped, tag = 'internal scratch']
  %s0 = inlined_call_operand.vmem [shape: bf16[64,32], index: 0, kind: input, shape index: {}]
  %s1 = inlined_call_operand.vmem [shape: bf16[32,64], index: 1, kind: input, shape index: {}]
  %s2 = inlined_call_operand.vmem [shape: bf16[64,128], index: 2, kind: input, shape index: {}]
  %s3 = inlined_call_operand.hbm [shape: bf16[128,128], index: 3, kind: input, shape index: {}]
  %s4 = inlined_call_operand.vmem [shape: f32[1,64], index: 4, kind: input, shape index: {}]
  %s5 = inlined_call_operand.vmem [shape: f32[1,128], index: 5, kind: input, shape index: {}]
  %s6 = inlined_call_operand.vmem [shape: f32[1,128], index: 6, kind: input, shape index: {}]
  %s7 = inlined_call_operand.hbm [shape: f32[64,128], index: 7, kind: output, shape index: {}]
  %s8 = sld [smem:[#allocation0]]
  $region42: #{tpu_custom_call.1} parent=0
    _
  %s10 = ssub.s32 1, %s8
  %s11 = scalar_select 0, %s10, %s8
  $region1: #{tpu_custom_call.1} parent=0
    #allocation2 [shape = 'u8[32768]{0}', space=vmem, size = 0x8000, scoped, tag = 'input window, operand 3, single buffered']
    #allocation3 [shape = 's32[1]{0}', space=sflag, size = 0x4, scoped, tag = 'scoped memory for tpu_custom_call.1']
    #allocation4 [shape = 's32[1]{0}', space=sflag, size = 0x4, scoped, tag = 'scoped memory for tpu_custom_call.1']
    #allocation5 [shape = 'u8[32768]{0}', space=vmem, size = 0x8000, scoped, tag = 'output window, operand 0, single buffered']
    %12 = vsyncpa [#allocation3], 0
    %13 = vsyncpa [#allocation4], 0
    // Predicated region
    $region2: #{tpu_custom_call.1} parent=1 // pred_check
      _
    $region3: #{tpu_custom_call.1} parent=1 // pred_check_branch
      %15 = sbr.rel (0) target = $region5
    $region4: #{tpu_custom_call.1} parent=1 // pred_region
      _
    $region5: #{tpu_custom_call.1} parent=1 // pred_fallthru
      _
    // Predicated region
    $region6: #{tpu_custom_call.1} parent=1 // pred_check
      _
    $region7: #{tpu_custom_call.1} parent=1 // pred_check_branch
      %17 = sbr.rel (0) target = $region9
    $region8: #{tpu_custom_call.1} parent=1 // pred_region
      _
    $region9: #{tpu_custom_call.1} parent=1 // pred_fallthru
      _
    // Predicated region
    $region10: #{tpu_custom_call.1} parent=1 // pred_check
      _
    $region11: #{tpu_custom_call.1} parent=1 // pred_check_branch
      %19 = sbr.rel (0) target = $region13
    $region12: #{tpu_custom_call.1} parent=1 // pred_region
      _
    $region13: #{tpu_custom_call.1} parent=1 // pred_fallthru
      _
    // Predicated region
    $region14: #{tpu_custom_call.1} parent=1 // pred_check
      _
    $region15: #{tpu_custom_call.1} parent=1 // pred_check_branch
      %21 = sbr.rel (0) target = $region17
    $region16: #{tpu_custom_call.1} parent=1 // pred_region
      %s23 = ssub.s32 1024, 1024
      %24 = vsyncadd [#allocation3], %s23
      %s25 = sshll.u32 [#allocation2], 4
      %s26 = int_to_ptr.vmem [resolvable:$true] %s25
      %31 = dma.hbm_to_vmem [thread:$0]  %s3, 1024, %s26, [#allocation3], 64, 64, 4
    $region17: #{tpu_custom_call.1} parent=1 // pred_fallthru
      _
    // Predicated region
    $region18: #{tpu_custom_call.1} parent=1 // pred_check
      _
    $region19: #{tpu_custom_call.1} parent=1 // pred_check_branch
      %33 = sbr.rel (0) target = $region21
    $region20: #{tpu_custom_call.1} parent=1 // pred_region
      _
    $region21: #{tpu_custom_call.1} parent=1 // pred_fallthru
      _
    // Predicated region
    $region22: #{tpu_custom_call.1} parent=1 // pred_check
      _
    $region23: #{tpu_custom_call.1} parent=1 // pred_check_branch
      %35 = sbr.rel (0) target = $region25
    $region24: #{tpu_custom_call.1} parent=1 // pred_region
      _
    $region25: #{tpu_custom_call.1} parent=1 // pred_fallthru
      _
    // Predicated region
    $region26: #{tpu_custom_call.1} parent=1 // pred_check
      _
    $region27: #{tpu_custom_call.1} parent=1 // pred_check_branch
      %37 = sbr.rel (0) target = $region29
    $region28: #{tpu_custom_call.1} parent=1 // pred_region
      _
    $region29: #{tpu_custom_call.1} parent=1 // pred_fallthru
      _
    // Predicated region
    $region30: #{tpu_custom_call.1} parent=1 // pred_check
      _
    $region31: #{tpu_custom_call.1} parent=1 // pred_check_branch
      %39 = sbr.rel (0) target = $region33
    $region32: #{tpu_custom_call.1} parent=1 // pred_region
      %40 = dma.done [#allocation3], 1024
    $region33: #{tpu_custom_call.1} parent=1 // pred_fallthru
      _
    %v42 = vld [vmem:[%s0] sm:$0xf]
    %v43 = vld [vmem:[%s0 + $0x4] sm:$0xf]
    %v44 = vld [vmem:[%s0 + $0x8] sm:$0xf]
    %v45 = vld [vmem:[%s0 + $0xc] sm:$0xf]
    %v46 = vld [vmem:[%s0 + $0x10] sm:$0xf]
    %v47 = vld [vmem:[%s0 + $0x14] sm:$0xf]
    %v48 = vld [vmem:[%s0 + $0x18] sm:$0xf]
    %v49 = vld [vmem:[%s0 + $0x1c] sm:$0xf]
    %v50 = vld [vmem:[%s1] sm:$0xf]
    %v51 = vld [vmem:[%s1 + $0x4] sm:$0xf]
    %v52 = vld [vmem:[%s1 + $0x8] sm:$0xf]
    %v53 = vld [vmem:[%s1 + $0xc] sm:$0xf]
    %v54 = vld [vmem:[%s4] sm:$0x1]
    %v56 = vlaneseq
    %v57 = vshrl.u32 %v56, 7
    %v58 = vsub.s32 0, %v57
    %v59 = vrot.slane %v54, %v58
    %v69 = vunpack.c.l.b16 %v42
    %v70 = vunpack.c.l.b16 %v43
    %v71 = vunpack.c.l.b16 %v44
    %v72 = vunpack.c.l.b16 %v45
    %v73 = vunpack.c.l.b16 %v46
    %v74 = vunpack.c.l.b16 %v47
    %v75 = vunpack.c.l.b16 %v48
    %v76 = vunpack.c.l.b16 %v49
    %v77 = vpack.c.b16 %v70, %v69
    %v78 = vpack.c.b16 %v72, %v71
    %v79 = vpack.c.b16 %v74, %v73
    %v80 = vpack.c.b16 %v76, %v75
    %v85 = vunpack.c.l.b16 %v50
    %v86 = vunpack.c.l.b16 %v51
    %v87 = vunpack.c.l.b16 %v52
    %v88 = vunpack.c.l.b16 %v53
    %v89 = vpack.c.b16 %v86, %v85
    %v90 = vpack.c.b16 %v88, %v87
    %vm93 = vcmask 261120
    %v95 = vsel %vm93, %v77, 0
    %v98 = vsel %vm93, %v78, 0
    %v101 = vsel %vm93, %v79, 0
    %v104 = vsel %vm93, %v80, 0
    %106 = vmatprep.subr.bf16.mxu0 0
    %107 = vmatpush1.bf16.msra.mxu0 %v89
    %108 = vmatprep.subr.bf16.mxu0 0
    %109 = vmatpush1.bf16.msra.mxu0 %v90
    %110 = vmatprep.subr.bf16.mxu0 0
    %111 = vmatpush1.bf16.msra.mxu0 0
    %112 = vmatprep.subr.bf16.mxu0 0
    %113 = vmatpush1.bf16.msra.mxu0 0
    %114 = vmatprep.subr.bf16.mxu0 0
    %115 = vmatpush1.bf16.msra.mxu0 0
    %116 = vmatprep.subr.bf16.mxu0 0
    %117 = vmatpush1.bf16.msra.mxu0 0
    %118 = vmatprep.subr.bf16.mxu0 0
    %119 = vmatpush1.bf16.msra.mxu0 0
    %120 = vmatprep.subr.bf16.mxu0 0
    %121 = vmatpush1.bf16.msra.mxu0 0
    %122 = vmatprep.subr.bf16.mxu0 0
    %123 = vmatpush1.bf16.msra.mxu0 0
    %124 = vmatprep.subr.bf16.mxu0 0
    %125 = vmatpush1.bf16.msra.mxu0 0
    %126 = vmatprep.subr.bf16.mxu0 0
    %127 = vmatpush1.bf16.msra.mxu0 0
    %128 = vmatprep.subr.bf16.mxu0 0
    %129 = vmatpush1.bf16.msra.mxu0 0
    %130 = vmatprep.subr.bf16.mxu0 0
    %131 = vmatpush1.bf16.msra.mxu0 0
    %132 = vmatprep.subr.bf16.mxu0 0
    %133 = vmatpush1.bf16.msra.mxu0 0
    %134 = vmatprep.subr.bf16.mxu0 0
    %135 = vmatpush1.bf16.msra.mxu0 0
    %136 = vmatprep.subr.bf16.mxu0 0
    %137 = vmatpush1.bf16.msra.mxu0 0
    %138 = vmatprep.mubr.bf16.mxu0 0
    %139 = vmatmul.mubr.bf16.gmra.mrb[0].mxu0 %v95
    %v140 = vpop.f32.mrb[0].mxu0
    %v141 = vadd.f32 %v59, %v140
    %v142 = vpop.f32.mrb[0].mxu0
    %v143 = vpop.f32.mrb[0].mxu0
    %v144 = vadd.f32 %v59, %v143
    %v145 = vpop.f32.mrb[0].mxu0
    %146 = vmatprep.mubr.bf16.mxu0 0
    %147 = vmatmul.mubr.bf16.gmra.mrb[0].mxu0 %v98
    %v148 = vpop.f32.mrb[0].mxu0
    %v149 = vadd.f32 %v59, %v148
    %v150 = vpop.f32.mrb[0].mxu0
    %v151 = vpop.f32.mrb[0].mxu0
    %v152 = vadd.f32 %v59, %v151
    %v153 = vpop.f32.mrb[0].mxu0
    %154 = vmatprep.mubr.bf16.mxu0 0
    %155 = vmatmul.mubr.bf16.gmra.mrb[0].mxu0 %v101
    %v156 = vpop.f32.mrb[0].mxu0
    %v157 = vadd.f32 %v59, %v156
    %v158 = vpop.f32.mrb[0].mxu0
    %v159 = vpop.f32.mrb[0].mxu0
    %v160 = vadd.f32 %v59, %v159
    %v161 = vpop.f32.mrb[0].mxu0
    %162 = vmatprep.mubr.bf16.mxu0 0
    %163 = vmatmul.mubr.bf16.gmra.mrb[0].mxu0 %v104
    %v164 = vpop.f32.mrb[0].mxu0
    %v165 = vadd.f32 %v59, %v164
    %v166 = vpop.f32.mrb[0].mxu0
    %v167 = vpop.f32.mrb[0].mxu0
    %v168 = vadd.f32 %v59, %v167
    %v169 = vpop.f32.mrb[0].mxu0
    %170 = vdwg.mxu0
    %v171 = vmax.f32 %v141, 0.0
    %v172 = vmax.f32 %v144, 0.0
    %v173 = vmax.f32 %v149, 0.0
    %v174 = vmax.f32 %v152, 0.0
    %v175 = vmax.f32 %v157, 0.0
    %v176 = vmax.f32 %v160, 0.0
    %v177 = vmax.f32 %v165, 0.0
    %v178 = vmax.f32 %v168, 0.0
    %v179 = vpack.c.bf16 %v172, %v171
    %v180 = vpack.c.bf16 %v174, %v173
    %v181 = vpack.c.bf16 %v176, %v175
    %v182 = vpack.c.bf16 %v178, %v177
    %v183 = vld [vmem:[%s2] sm:$0xf]
    %v184 = vld [vmem:[%s2 + $0x4] sm:$0xf]
    %v185 = vld [vmem:[%s2 + $0x8] sm:$0xf]
    %v186 = vld [vmem:[%s2 + $0xc] sm:$0xf]
    %v187 = vld [vmem:[%s2 + $0x10] sm:$0xf]
    %v188 = vld [vmem:[%s2 + $0x14] sm:$0xf]
    %v189 = vld [vmem:[%s2 + $0x18] sm:$0xf]
    %v190 = vld [vmem:[%s2 + $0x1c] sm:$0xf]
    %v191 = vld [vmem:[%s5] sm:$0x1]
    %v193 = vlaneseq
    %v194 = vshrl.u32 %v193, 7
    %v195 = vsub.s32 0, %v194
    %v196 = vrot.slane %v191, %v195
    %v206 = vunpack.c.l.b16 %v183
    %v207 = vunpack.c.l.b16 %v184
    %v208 = vunpack.c.l.b16 %v185
    %v209 = vunpack.c.l.b16 %v186
    %v210 = vunpack.c.l.b16 %v187
    %v211 = vunpack.c.l.b16 %v188
    %v212 = vunpack.c.l.b16 %v189
    %v213 = vunpack.c.l.b16 %v190
    %v214 = vpack.c.b16 %v207, %v206
    %v215 = vpack.c.b16 %v209, %v208
    %v216 = vpack.c.b16 %v211, %v210
    %v217 = vpack.c.b16 %v213, %v212
    %vm222 = vcmask 523264
    %v224 = vsel %vm222, %v179, 0
    %v227 = vsel %vm222, %v180, 0
    %v230 = vsel %vm222, %v181, 0
    %v233 = vsel %vm222, %v182, 0
    %235 = vmatprep.subr.bf16.mxu0 0
    %236 = vmatpush1.bf16.msra.mxu0 %v214
    %237 = vmatprep.subr.bf16.mxu0 0
    %238 = vmatpush1.bf16.msra.mxu0 %v215
    %239 = vmatprep.subr.bf16.mxu0 0
    %240 = vmatpush1.bf16.msra.mxu0 %v216
    %241 = vmatprep.subr.bf16.mxu0 0
    %242 = vmatpush1.bf16.msra.mxu0 %v217
    %243 = vmatprep.subr.bf16.mxu0 0
    %244 = vmatpush1.bf16.msra.mxu0 0
    %245 = vmatprep.subr.bf16.mxu0 0
    %246 = vmatpush1.bf16.msra.mxu0 0
    %247 = vmatprep.subr.bf16.mxu0 0
    %248 = vmatpush1.bf16.msra.mxu0 0
    %249 = vmatprep.subr.bf16.mxu0 0
    %250 = vmatpush1.bf16.msra.mxu0 0
    %251 = vmatprep.subr.bf16.mxu0 0
    %252 = vmatpush1.bf16.msra.mxu0 0
    %253 = vmatprep.subr.bf16.mxu0 0
    %254 = vmatpush1.bf16.msra.mxu0 0
    %255 = vmatprep.subr.bf16.mxu0 0
    %256 = vmatpush1.bf16.msra.mxu0 0
    %257 = vmatprep.subr.bf16.mxu0 0
    %258 = vmatpush1.bf16.msra.mxu0 0
    %259 = vmatprep.subr.bf16.mxu0 0
    %260 = vmatpush1.bf16.msra.mxu0 0
    %261 = vmatprep.subr.bf16.mxu0 0
    %262 = vmatpush1.bf16.msra.mxu0 0
    %263 = vmatprep.subr.bf16.mxu0 0
    %264 = vmatpush1.bf16.msra.mxu0 0
    %265 = vmatprep.subr.bf16.mxu0 0
    %266 = vmatpush1.bf16.msra.mxu0 0
    %267 = vmatprep.mubr.bf16.mxu0 0
    %268 = vmatmul.mubr.bf16.gmra.mrb[0].mxu0 %v224
    %v269 = vpop.f32.mrb[0].mxu0
    %v270 = vadd.f32 %v196, %v269
    %v271 = vpop.f32.mrb[0].mxu0
    %v272 = vpop.f32.mrb[0].mxu0
    %v273 = vadd.f32 %v196, %v272
    %v274 = vpop.f32.mrb[0].mxu0
    %275 = vmatprep.mubr.bf16.mxu0 0
    %276 = vmatmul.mubr.bf16.gmra.mrb[0].mxu0 %v227
    %v277 = vpop.f32.mrb[0].mxu0
    %v278 = vadd.f32 %v196, %v277
    %v279 = vpop.f32.mrb[0].mxu0
    %v280 = vpop.f32.mrb[0].mxu0
    %v281 = vadd.f32 %v196, %v280
    %v282 = vpop.f32.mrb[0].mxu0
    %283 = vmatprep.mubr.bf16.mxu0 0
    %284 = vmatmul.mubr.bf16.gmra.mrb[0].mxu0 %v230
    %v285 = vpop.f32.mrb[0].mxu0
    %v286 = vadd.f32 %v196, %v285
    %v287 = vpop.f32.mrb[0].mxu0
    %v288 = vpop.f32.mrb[0].mxu0
    %v289 = vadd.f32 %v196, %v288
    %v290 = vpop.f32.mrb[0].mxu0
    %291 = vmatprep.mubr.bf16.mxu0 0
    %292 = vmatmul.mubr.bf16.gmra.mrb[0].mxu0 %v233
    %v293 = vpop.f32.mrb[0].mxu0
    %v294 = vadd.f32 %v196, %v293
    %v295 = vpop.f32.mrb[0].mxu0
    %v296 = vpop.f32.mrb[0].mxu0
    %v297 = vadd.f32 %v196, %v296
    %v298 = vpop.f32.mrb[0].mxu0
    %299 = vdwg.mxu0
    %v300 = vmax.f32 %v270, 0.0
    %v301 = vmax.f32 %v273, 0.0
    %v302 = vmax.f32 %v278, 0.0
    %v303 = vmax.f32 %v281, 0.0
    %v304 = vmax.f32 %v286, 0.0
    %v305 = vmax.f32 %v289, 0.0
    %v306 = vmax.f32 %v294, 0.0
    %v307 = vmax.f32 %v297, 0.0
    %v308 = vpack.c.bf16 %v301, %v300
    %v309 = vpack.c.bf16 %v303, %v302
    %v310 = vpack.c.bf16 %v305, %v304
    %v311 = vpack.c.bf16 %v307, %v306
    %v312 = vld [vmem:[#allocation2] sm:$0xf]
    %v313 = vld [vmem:[#allocation2 + $0x4] sm:$0xf]
    %v314 = vld [vmem:[#allocation2 + $0x8] sm:$0xf]
    %v315 = vld [vmem:[#allocation2 + $0xc] sm:$0xf]
    %v316 = vld [vmem:[#allocation2 + $0x10] sm:$0xf]
    %v317 = vld [vmem:[#allocation2 + $0x14] sm:$0xf]
    %v318 = vld [vmem:[#allocation2 + $0x18] sm:$0xf]
    %v319 = vld [vmem:[#allocation2 + $0x1c] sm:$0xf]
    %v320 = vld [vmem:[#allocation2 + $0x20] sm:$0xf]
    %v321 = vld [vmem:[#allocation2 + $0x24] sm:$0xf]
    %v322 = vld [vmem:[#allocation2 + $0x28] sm:$0xf]
    %v323 = vld [vmem:[#allocation2 + $0x2c] sm:$0xf]
    %v324 = vld [vmem:[#allocation2 + $0x30] sm:$0xf]
    %v325 = vld [vmem:[#allocation2 + $0x34] sm:$0xf]
    %v326 = vld [vmem:[#allocation2 + $0x38] sm:$0xf]
    %v327 = vld [vmem:[#allocation2 + $0x3c] sm:$0xf]
    %v328 = vld [vmem:[%s6] sm:$0x1]
    %v330 = vlaneseq
    %v331 = vshrl.u32 %v330, 7
    %v332 = vsub.s32 0, %v331
    %v333 = vrot.slane %v328, %v332
    %v351 = vunpack.c.l.b16 %v312
    %v352 = vunpack.c.l.b16 %v313
    %v353 = vunpack.c.l.b16 %v314
    %v354 = vunpack.c.l.b16 %v315
    %v355 = vunpack.c.l.b16 %v316
    %v356 = vunpack.c.l.b16 %v317
    %v357 = vunpack.c.l.b16 %v318
    %v358 = vunpack.c.l.b16 %v319
    %v359 = vunpack.c.l.b16 %v320
    %v360 = vunpack.c.l.b16 %v321
    %v361 = vunpack.c.l.b16 %v322
    %v362 = vunpack.c.l.b16 %v323
    %v363 = vunpack.c.l.b16 %v324
    %v364 = vunpack.c.l.b16 %v325
    %v365 = vunpack.c.l.b16 %v326
    %v366 = vunpack.c.l.b16 %v327
    %v367 = vpack.c.b16 %v352, %v351
    %v368 = vpack.c.b16 %v354, %v353
    %v369 = vpack.c.b16 %v356, %v355
    %v370 = vpack.c.b16 %v358, %v357
    %v371 = vpack.c.b16 %v360, %v359
    %v372 = vpack.c.b16 %v362, %v361
    %v373 = vpack.c.b16 %v364, %v363
    %v374 = vpack.c.b16 %v366, %v365
    %383 = vmatprep.subr.bf16.mxu0 0
    %384 = vmatpush1.bf16.msra.mxu0 %v367
    %385 = vmatprep.subr.bf16.mxu0 0
    %386 = vmatpush1.bf16.msra.mxu0 %v368
    %387 = vmatprep.subr.bf16.mxu0 0
    %388 = vmatpush1.bf16.msra.mxu0 %v369
    %389 = vmatprep.subr.bf16.mxu0 0
    %390 = vmatpush1.bf16.msra.mxu0 %v370
    %391 = vmatprep.subr.bf16.mxu0 0
    %392 = vmatpush1.bf16.msra.mxu0 %v371
    %393 = vmatprep.subr.bf16.mxu0 0
    %394 = vmatpush1.bf16.msra.mxu0 %v372
    %395 = vmatprep.subr.bf16.mxu0 0
    %396 = vmatpush1.bf16.msra.mxu0 %v373
    %397 = vmatprep.subr.bf16.mxu0 0
    %398 = vmatpush1.bf16.msra.mxu0 %v374
    %399 = vmatprep.subr.bf16.mxu0 0
    %400 = vmatpush1.bf16.msra.mxu0 0
    %401 = vmatprep.subr.bf16.mxu0 0
    %402 = vmatpush1.bf16.msra.mxu0 0
    %403 = vmatprep.subr.bf16.mxu0 0
    %404 = vmatpush1.bf16.msra.mxu0 0
    %405 = vmatprep.subr.bf16.mxu0 0
    %406 = vmatpush1.bf16.msra.mxu0 0
    %407 = vmatprep.subr.bf16.mxu0 0
    %408 = vmatpush1.bf16.msra.mxu0 0
    %409 = vmatprep.subr.bf16.mxu0 0
    %410 = vmatpush1.bf16.msra.mxu0 0
    %411 = vmatprep.subr.bf16.mxu0 0
    %412 = vmatpush1.bf16.msra.mxu0 0
    %413 = vmatprep.subr.bf16.mxu0 0
    %414 = vmatpush1.bf16.msra.mxu0 0
    %415 = vmatprep.mubr.bf16.mxu0 0
    %416 = vmatmul.mubr.bf16.gmra.mrb[0].mxu0 %v308
    %v417 = vpop.f32.mrb[0].mxu0
    %v418 = vadd.f32 %v333, %v417
    %v419 = vpop.f32.mrb[0].mxu0
    %v420 = vpop.f32.mrb[0].mxu0
    %v421 = vadd.f32 %v333, %v420
    %v422 = vpop.f32.mrb[0].mxu0
    %423 = vmatprep.mubr.bf16.mxu0 0
    %424 = vmatmul.mubr.bf16.gmra.mrb[0].mxu0 %v309
    %v425 = vpop.f32.mrb[0].mxu0
    %v426 = vadd.f32 %v333, %v425
    %v427 = vpop.f32.mrb[0].mxu0
    %v428 = vpop.f32.mrb[0].mxu0
    %v429 = vadd.f32 %v333, %v428
    %v430 = vpop.f32.mrb[0].mxu0
    %431 = vmatprep.mubr.bf16.mxu0 0
    %432 = vmatmul.mubr.bf16.gmra.mrb[0].mxu0 %v310
    %v433 = vpop.f32.mrb[0].mxu0
    %v434 = vadd.f32 %v333, %v433
    %v435 = vpop.f32.mrb[0].mxu0
    %v436 = vpop.f32.mrb[0].mxu0
    %v437 = vadd.f32 %v333, %v436
    %v438 = vpop.f32.mrb[0].mxu0
    %439 = vmatprep.mubr.bf16.mxu0 0
    %440 = vmatmul.mubr.bf16.gmra.mrb[0].mxu0 %v311
    %v441 = vpop.f32.mrb[0].mxu0
    %v442 = vadd.f32 %v333, %v441
    %v443 = vpop.f32.mrb[0].mxu0
    %v444 = vpop.f32.mrb[0].mxu0
    %v445 = vadd.f32 %v333, %v444
    %v446 = vpop.f32.mrb[0].mxu0
    %447 = vdwg.mxu0
    %448 = vst [vmem:[#allocation5] sm:$0xff] %v418
    %449 = vst [vmem:[#allocation5 + $0x8] sm:$0xff] %v421
    %450 = vst [vmem:[#allocation5 + $0x10] sm:$0xff] %v426
    %451 = vst [vmem:[#allocation5 + $0x18] sm:$0xff] %v429
    %452 = vst [vmem:[#allocation5 + $0x20] sm:$0xff] %v434
    %453 = vst [vmem:[#allocation5 + $0x28] sm:$0xff] %v437
    %454 = vst [vmem:[#allocation5 + $0x30] sm:$0xff] %v442
    %455 = vst [vmem:[#allocation5 + $0x38] sm:$0xff] %v445
    // Predicated region
    $region34: #{tpu_custom_call.1} parent=1 // pred_check
      _
    $region35: #{tpu_custom_call.1} parent=1 // pred_check_branch
      %457 = sbr.rel (0) target = $region37
    $region36: #{tpu_custom_call.1} parent=1 // pred_region
      %s459 = ssub.s32 1024, 1024
      %460 = vsyncadd [#allocation4], %s459
      %s461 = sshll.u32 [#allocation5], 4
      %s462 = int_to_ptr.vmem [resolvable:$true] %s461
      %467 = dma.vmem_to_hbm [thread:$0]  %s462, 1024, %s7, [#allocation4], 128, 128, 8
    $region37: #{tpu_custom_call.1} parent=1 // pred_fallthru
      _
    // Predicated region
    $region38: #{tpu_custom_call.1} parent=1 // pred_check
      _
    $region39: #{tpu_custom_call.1} parent=1 // pred_check_branch
      %469 = sbr.rel (0) target = $region41
    $region40: #{tpu_custom_call.1} parent=1 // pred_region
      %470 = dma.done [#allocation4], 1024
    $region41: #{tpu_custom_call.1} parent=1 // pred_fallthru
      _
    %471 = vsyncpa [#allocation3], 1
    %472 = vsyncpa [#allocation4], 1

</llo_original>
